<compile_context>
chip_gen: v5e
topology: v5e:2x2
jax: 0.10.0
libtpu: 0.0.40
codegen_flags: <defaults>
</compile_context>

<pallas_src>
import jax
import jax.numpy as jnp
from jax import lax
from jax.experimental import pallas as pl
from jax.experimental.pallas import tpu as pltpu


def _round_up(x: int, m: int) -> int:
    return ((x + m - 1) // m) * m


def _vmem_capacity_bytes() -> int:
    try:
        return int(pltpu.get_tpu_info().vmem_capacity_bytes)
    except Exception:
        return 64 << 20  # conservative default (v7x per-TensorCore VMEM)


# ---------------------------------------------------------------------------
# Path A: table resident in VMEM, one-hot MXU gather per (T, Dpad) tile.
# ---------------------------------------------------------------------------
def _onehot_gather_kernel(idx_ref, table_ref, out_ref):
    idx = idx_ref[...]                          # (T, 1) int32
    tile = idx.shape[0]
    vocab = table_ref.shape[0]
    iota = lax.broadcasted_iota(jnp.int32, (tile, vocab), 1)
    one_hot = (iota == idx).astype(table_ref.dtype)            # (T, V)
    out_ref[...] = jnp.dot(
        one_hot, table_ref[...], preferred_element_type=jnp.float32
    ).astype(out_ref.dtype)


# ---------------------------------------------------------------------------
# Path B: table in HBM, manual row DMAs straight into the output block.
# ---------------------------------------------------------------------------
def _make_hbm_gather_kernel(tile_tokens: int, depth: int):
    def kernel(idx_ref, table_hbm, out_ref, copy_sems):
        base = pl.program_id(0) * tile_tokens

        def start_row(r, row):
            pltpu.make_async_copy(
                table_hbm.at[pl.ds(row, 1), :],
                out_ref.at[pl.ds(r, 1), :],
                copy_sems.at[r % depth],
            ).start()

        def wait_row(r):
            # Same-shaped descriptor; src position is irrelevant for the wait.
            pltpu.make_async_copy(
                table_hbm.at[pl.ds(0, 1), :],
                out_ref.at[pl.ds(r, 1), :],
                copy_sems.at[r % depth],
            ).wait()

        # Prime a `depth`-deep wave of outstanding row DMAs (static unroll).
        for r in range(depth):
            start_row(r, idx_ref[base + r])

        steady_trip = tile_tokens - depth
        if steady_trip > 0:
            # Steady state: read next index BEFORE waiting (the wait breaks
            # SMEM sst->sld forwarding), then wait oldest slot and reuse it.
            def steady(r, c):
                row = idx_ref[base + r]
                wait_row(r - depth)
                start_row(r, row)
                return c

            lax.fori_loop(depth, tile_tokens, steady, 0,
                          unroll=min(8, steady_trip))

        # Drain the tail (static bounds -> plain Python unroll).
        for r in range(tile_tokens - depth, tile_tokens):
            wait_row(r)

        # No staging buffer / no dense VMEM->VMEM copy: rows already live in
        # the output block; the pipeline's writeback DMA sources it directly.

    return kernel


# ---------------------------------------------------------------------------
# Wrapper
# ---------------------------------------------------------------------------
def embedding_lookup_pallas(emb_table: jax.Array, flat_idx: jax.Array,
                            *, tile_tokens: int | None = None,
                            force_hbm_gather: bool = False) -> jax.Array:
    """Gather rows of emb_table (V, D) at flat_idx (N,) -> (N, D)."""
    vocab, d = emb_table.shape
    n = flat_idx.shape[0]
    dt_size = jnp.dtype(emb_table.dtype).itemsize

    # Tile of tokens per grid step: multiple of 8 (sublane-dense), capped at
    # 256, and sized so short sequences still yield >= 2 grid steps (keeps
    # both v7x TensorCores busy under dimension_semantics=("parallel",)).
    if tile_tokens is None:
        tile_tokens = min(256, max(8, _round_up(-(-n // 2), 8)))
    tile_tokens = max(8, min(_round_up(tile_tokens, 8), _round_up(n, 8)))

    n_pad = _round_up(n, tile_tokens)
    num_tiles = n_pad // tile_tokens

    # Clamp (matches jnp.take for out-of-range indices; keeps DMAs in bounds;
    # note PyTorch nn.Embedding would raise instead) and pad to the tile grid
    # (pad rows are discarded after the call).
    idx = jnp.clip(flat_idx.astype(jnp.int32), 0, vocab - 1)
    idx = jnp.pad(idx, (0, n_pad - n))

    cap = _vmem_capacity_bytes()
    table_bytes = vocab * d * dt_size
    # Resident one-hot gather does O(T*V*D) MXU work for O(T*D) useful bytes,
    # so keep the vocab cap small; the VMEM gate accounts for the pipeline
    # double-buffering the (constant-index) table.
    use_resident = (not force_hbm_gather) and vocab <= 2048 \
        and table_bytes <= int(0.2 * cap)

    if use_resident:
        d_pad = _round_up(d, 128)            # lane-dense output block
        table = emb_table if d_pad == d else jnp.pad(
            emb_table, ((0, 0), (0, d_pad - d)))
        need = (2 * vocab * d_pad * dt_size            # table (double-buffered)
                + 2 * tile_tokens * d_pad * dt_size    # output (double-buffered)
                + tile_tokens * vocab * 4              # one-hot temp
                + (4 << 20))
        vmem_limit = int(min(0.9 * cap, max(need, 32 << 20)))
        grid_spec = pltpu.PrefetchScalarGridSpec(
            num_scalar_prefetch=0,
            grid=(num_tiles,),
            in_specs=[
                pl.BlockSpec((tile_tokens, 1), lambda t: (t, 0)),   # indices
                pl.BlockSpec((vocab, d_pad), lambda t: (0, 0)),     # table (resident)
            ],
            out_specs=pl.BlockSpec((tile_tokens, d_pad), lambda t: (t, 0)),
        )
        out = pl.pallas_call(
            _onehot_gather_kernel,
            grid_spec=grid_spec,
            out_shape=jax.ShapeDtypeStruct((n_pad, d_pad), emb_table.dtype),
            compiler_params=pltpu.CompilerParams(
                dimension_semantics=("parallel",),
                vmem_limit_bytes=vmem_limit,
            ),
        )(idx.reshape(n_pad, 1), table)
        return out[:n, :d]
    else:
        # TODO(synk): a VMEM-resident row-copy gather for mid-size vocabs on
        # 128 MiB parts would beat this HBM per-row DMA path; not implemented.
        depth = min(16, tile_tokens)
        need = 2 * tile_tokens * d * dt_size + (4 << 20)
        vmem_limit = int(min(0.9 * cap, max(need, 32 << 20)))
        grid_spec = pltpu.PrefetchScalarGridSpec(
            num_scalar_prefetch=1,                  # indices -> SMEM
            grid=(num_tiles,),
            in_specs=[pl.BlockSpec(memory_space=pl.ANY)],   # table stays in HBM
            out_specs=pl.BlockSpec((tile_tokens, d), lambda t, idx_ref: (t, 0)),
            scratch_shapes=[pltpu.SemaphoreType.DMA((depth,))],
        )
        out = pl.pallas_call(
            _make_hbm_gather_kernel(tile_tokens, depth),
            grid_spec=grid_spec,
            out_shape=jax.ShapeDtypeStruct((n_pad, d), emb_table.dtype),
            compiler_params=pltpu.CompilerParams(
                dimension_semantics=("parallel",),
                vmem_limit_bytes=vmem_limit,
            ),
        )(idx, emb_table)
        return out[:n]


class EmbeddingsPallas:
    """JAX/Pallas port of the PyTorch `Embeddings` module (single word feature)."""

    def __init__(self, word_vec_size, word_vocab_size, word_padding_idx,
                 feat_merge="concat", freeze_word_vecs=False, key=None):
        self.word_vec_size = word_vec_size
        self.word_vocab_size = word_vocab_size
        self.word_padding_idx = word_padding_idx
        self.embedding_size = word_vec_size

        if key is None:
            key = jax.random.PRNGKey(0)
        # nn.Embedding default init ~ N(0, 1); padding row zeroed.
        # Padding-row zeroing stays correct only as long as that row is never
        # updated (grads to it are masked in training), matching padding_idx.
        weight = jax.random.normal(
            key, (word_vocab_size, word_vec_size), dtype=jnp.float32
        )
        weight = weight.at[word_padding_idx].set(0.0)
        self.word_lut_weight = weight

    def __call__(self, source, step=None):
        """source: int tensor (len, batch, nfeat=1) -> (len, batch, word_vec_size)."""
        assert source.ndim == 3 and source.shape[2] == 1, "single word feature only"
        seq_len, batch, _ = source.shape
        flat_idx = source[:, :, 0].reshape(seq_len * batch)
        flat_emb = embedding_lookup_pallas(self.word_lut_weight, flat_idx)
        # merge == 'concat' with a single feature is identity on the concat axis.
        return flat_emb.reshape(seq_len, batch, self.word_vec_size)


def _reference_lookup(weight, source):
    return jnp.take(weight, source[:, :, 0], axis=0)


if __name__ == "__main__":
    key = jax.random.PRNGKey(0)
    k_w, k_idx, k_idx2 = jax.random.split(key, 3)

    # Small shapes: seq=8, batch=2, one word feature, vocab=64, hidden=128.
    seq_len, batch, nfeat = 8, 2, 1
    word_vocab_size = 64
    word_vec_size = 128
    word_padding_idx = 1

    emb = EmbeddingsPallas(
        word_vec_size=word_vec_size,
        word_vocab_size=word_vocab_size,
        word_padding_idx=word_padding_idx,
        feat_merge="concat",
        key=k_w,
    )

    source = jax.random.randint(
        k_idx, (seq_len, batch, nfeat), minval=0, maxval=word_vocab_size,
        dtype=jnp.int32,
    )
    # Make sure at least one padding token is exercised.
    source = source.at[0, 0, 0].set(word_padding_idx)

    # Default path: 16 tokens -> tile=8, 2 grid steps, resident one-hot gather.
    out = jax.block_until_ready(emb(source))
    assert out.shape == (seq_len, batch, word_vec_size)
    assert out.dtype == jnp.float32

    ref = _reference_lookup(emb.word_lut_weight, source)
    assert jnp.allclose(out, ref), "Pallas embedding lookup mismatch (resident path)"
    assert jnp.allclose(out[0, 0], 0.0), "padding row must be zero"

    # Extra checks on both paths, including the HBM steady-state DMA loop.
    flat = source[:, :, 0].reshape(-1)
    flat_ref = jnp.take(emb.word_lut_weight, flat, axis=0)

    out_tiled = jax.block_until_ready(
        embedding_lookup_pallas(emb.word_lut_weight, flat, tile_tokens=8))
    assert jnp.allclose(out_tiled, flat_ref), "multi-tile resident path mismatch"

    # HBM path, tile == depth (prime + drain only).
    out_hbm = jax.block_until_ready(
        embedding_lookup_pallas(emb.word_lut_weight, flat, tile_tokens=8,
                                force_hbm_gather=True))
    assert jnp.allclose(out_hbm, flat_ref), "HBM manual-DMA gather path mismatch"

    # HBM path, tile > depth: exercises the partially-unrolled steady loop.
    flat_big = jax.random.randint(
        k_idx2, (64,), minval=0, maxval=word_vocab_size, dtype=jnp.int32)
    flat_big_ref = jnp.take(emb.word_lut_weight, flat_big, axis=0)
    out_hbm_big = jax.block_until_ready(
        embedding_lookup_pallas(emb.word_lut_weight, flat_big, tile_tokens=32,
                                force_hbm_gather=True))
    assert jnp.allclose(out_hbm_big, flat_big_ref), \
        "HBM gather steady-state loop mismatch"

    print("KERNEL_OK")
</pallas_src>

<mosaic_0001>
module attributes {stable_mosaic.version = 11 : i64} {
  func.func @_onehot_gather_kernel(%arg0: i32, %arg1: memref<8x1xi32, #tpu.memory_space<vmem>>, %arg2: memref<64x128xf32, #tpu.memory_space<vmem>>, %arg3: memref<8x128xf32, #tpu.memory_space<vmem>>) attributes {dimension_semantics = [#tpu.dimension_semantics<parallel>], iteration_bounds = array<i64: 2>, scalar_prefetch = 0 : i64, scratch_operands = 0 : i64, tpu.core_type = #tpu.core_type<tc>, window_params = [{transform_indices = @transform_0, window_bounds = array<i64: 8, 1>}, {pipeline_mode = #tpu.pipeline_mode<synchronous>, transform_indices = @transform_1, window_bounds = array<i64: 64, 128>}, {transform_indices = @transform_2, window_bounds = array<i64: 8, 128>}]} {
    %c0 = arith.constant 0 : index
    %c0_0 = arith.constant 0 : index
    %0 = vector.load %arg1[%c0, %c0_0] : memref<8x1xi32, #tpu.memory_space<vmem>>, vector<8x1xi32>
    %1 = tpu.iota {dimensions = array<i32: 1>} : vector<8x64xi32>
    %2 = vector.broadcast %0 : vector<8x1xi32> to vector<8x64xi32>
    %3 = arith.cmpi eq, %1, %2 : vector<8x64xi32>
    %4 = arith.extui %3 : vector<8x64xi1> to vector<8x64xi32>
    %5 = arith.sitofp %4 : vector<8x64xi32> to vector<8x64xf32>
    %c0_1 = arith.constant 0 : index
    %c0_2 = arith.constant 0 : index
    %6 = vector.load %arg2[%c0_1, %c0_2] : memref<64x128xf32, #tpu.memory_space<vmem>>, vector<64x128xf32>
    %cst = arith.constant dense<0.000000e+00> : vector<8x128xf32>
    %7 = tpu.matmul %5, %6, %cst {dimension_numbers = #tpu.dot_dimension_numbers<[1], [0], [0], [1], [0, 0, 1, 1], [], []>} : vector<8x64xf32>, vector<64x128xf32>, vector<8x128xf32> -> vector<8x128xf32>
    %c0_3 = arith.constant 0 : index
    %c0_4 = arith.constant 0 : index
    %8 = vector.load %arg3[%c0_3, %c0_4] : memref<8x128xf32, #tpu.memory_space<vmem>>, vector<8x128xf32>
    tpu.vector_store %arg3[%c0_3, %c0_4], %7 {strides = array<i32>} : memref<8x128xf32, #tpu.memory_space<vmem>>, vector<8x128xf32>,
    return
  }
  func.func @transform_0(%arg0: i32) -> (i32, i32) {
    %c0_i32 = arith.constant 0 : i32
    %c0_i32_0 = arith.constant 0 : i32
    return %arg0, %c0_i32 : i32, i32
  }
  func.func @transform_1(%arg0: i32) -> (i32, i32) {
    %c0_i32 = arith.constant 0 : i32
    %c0_i32_0 = arith.constant 0 : i32
    %c0_i32_1 = arith.constant 0 : i32
    return %c0_i32, %c0_i32_0 : i32, i32
  }
  func.func @transform_2(%arg0: i32) -> (i32, i32) {
    %c0_i32 = arith.constant 0 : i32
    %c0_i32_0 = arith.constant 0 : i32
    return %arg0, %c0_i32 : i32, i32
  }
}

</mosaic_0001>

<llo_original>
// kernel: tpu_custom_call.1
$region0: #{tpu_custom_call.1}
  #allocation0 [shape = 'u32[]', space=smem, size = 0x4, offset = 0x4, fixed_abs, tag = 'smem constant byte address 0x4 - core index']
  #allocation1 [shape = 'u32[72,128]{1,0:T(1,128)}', space=vmem, size = 0x9000, scoped, tag = 'internal scratch']
  %s0 = inlined_call_operand.vmem [shape: s32[16,1], index: 0, kind: input, shape index: {}]
  %s1 = inlined_call_operand.hbm [shape: f32[64,128], index: 1, kind: input, shape index: {}]
  %s2 = inlined_call_operand.hbm [shape: f32[16,128], index: 2, kind: output, shape index: {}]
  %s3 = sld [smem:[#allocation0]]
  $region45: #{tpu_custom_call.1} parent=0
    _
  %s5 = ssub.s32 1, %s3
  %s6 = scalar_select 0, %s5, %s3
  $region1: #{tpu_custom_call.1} parent=0
    #allocation2 [shape = 'u8[32768]{0}', space=vmem, size = 0x8000, scoped, tag = 'input window, operand 1, single buffered']
    #allocation3 [shape = 's32[2]{0}', space=sflag, size = 0x8, scoped, tag = 'scoped memory for tpu_custom_call.1']
    #allocation4 [shape = 's32[2]{0}', space=sflag, size = 0x8, scoped, tag = 'scoped memory for tpu_custom_call.1']
    #allocation5 [shape = 'u8[8192]{0}', space=vmem, size = 0x2000, scoped, tag = 'output window, operand 0']
    %7 = vsyncpa [#allocation3], 0
    %8 = vsyncpa [#allocation4], 0
    %s9 = scalar_lea.sflag [#allocation4], 1
    %10 = vsyncpa %s9, 0
    loop: start=0, step=1, limit=4
    $region2: #{tpu_custom_call.1} parent=1 // loop_pre_header
      _
    $region3: #{tpu_custom_call.1} parent=1 // loop_header
      %s12 = sphi 0, %s16
      %p13 = scmp.ge.s32.totalorder %s12, 4
      %s22 = sphi 0, %s24
      %s25 = sphi 0, %s22
      %s26 = sphi 0, %s25
      %s42 = sphi 0, %s26
      %s46 = sphi 0, %s46
      %s48 = sphi 0, %s46
      %s49 = sphi 0, %s48
      %s63 = sphi 0, %s49
      %s69 = sphi 0, %s71
      %s72 = sphi 0, %s69
      %s73 = sphi 0, %s72
      %s89 = sphi 0, %s73
    $region4: #{tpu_custom_call.1} parent=1 // loop_header_branch
      %15 = sbr.rel (%p13) target = $region8
    $region5: #{tpu_custom_call.1} parent=1 // loop_body
      %s17 = ssub.s32 %s12, 1
      %s18 = ssub.s32 %s12, 2
      %s19 = sadd.s32 %s12, 1
      %s20 = ssub.s32 %s12, %s19
      %p21 = scmp.eq.s32.totalorder %s20, 0
      %s23 = sadd.s32 %s22, 1
      %s24 = scalar_select %p21, %s22, %s23
      %p27 = pneg %p21
      %p28 = scmp.eq.s32.totalorder %s12, 1
      %p29 = por %p27, %p28
      %p30 = scmp.ne.s32.totalorder %s22, %s25
      %p31 = scmp.eq.s32.totalorder %s12, 0
      %p32 = por %p30, %p31
      %p33 = scmp.ne.s32.totalorder %s22, %s25
      %p34 = scmp.eq.s32.totalorder %s17, 1
      %p35 = por %p33, %p34
      %p36 = scmp.ne.s32.totalorder %s25, %s26
      %p37 = scmp.eq.s32.totalorder %s17, 0
      %p38 = por %p36, %p37
      %p39 = scmp.ne.s32.totalorder %s25, %s26
      %p40 = scmp.eq.s32.totalorder %s18, 1
      %p41 = por %p39, %p40
      %p43 = scmp.ne.s32.totalorder %s26, %s42
      %p44 = scmp.eq.s32.totalorder %s18, 0
      %p45 = por %p43, %p44
      %s47 = sadd.s32 %s46, 1
      %p50 = scmp.eq.s32.totalorder %s12, 1
      %p51 = scmp.ne.s32.totalorder %s46, %s48
      %p52 = scmp.eq.s32.totalorder %s12, 0
      %p53 = por %p51, %p52
      %p54 = scmp.ne.s32.totalorder %s46, %s48
      %p55 = scmp.eq.s32.totalorder %s17, 1
      %p56 = por %p54, %p55
      %p57 = scmp.ne.s32.totalorder %s48, %s49
      %p58 = scmp.eq.s32.totalorder %s17, 0
      %p59 = por %p57, %p58
      %p60 = scmp.ne.s32.totalorder %s48, %s49
      %p61 = scmp.eq.s32.totalorder %s18, 1
      %p62 = por %p60, %p61
      %p64 = scmp.ne.s32.totalorder %s49, %s63
      %p65 = scmp.eq.s32.totalorder %s18, 0
      %p66 = por %p64, %p65
      %s67 = ssub.s32 %s12, %s19
      %p68 = scmp.eq.s32.totalorder %s67, 0
      %s70 = sadd.s32 %s69, 1
      %s71 = scalar_select %p68, %s69, %s70
      %p74 = pneg %p68
      %p75 = scmp.eq.s32.totalorder %s12, 1
      %p76 = por %p74, %p75
      %p77 = scmp.ne.s32.totalorder %s69, %s72
      %p78 = scmp.eq.s32.totalorder %s12, 0
      %p79 = por %p77, %p78
      %p80 = scmp.ne.s32.totalorder %s69, %s72
      %p81 = scmp.eq.s32.totalorder %s17, 1
      %p82 = por %p80, %p81
      %p83 = scmp.ne.s32.totalorder %s72, %s73
      %p84 = scmp.eq.s32.totalorder %s17, 0
      %p85 = por %p83, %p84
      %p86 = scmp.ne.s32.totalorder %s72, %s73
      %p87 = scmp.eq.s32.totalorder %s18, 1
      %p88 = por %p86, %p87
      %p90 = scmp.ne.s32.totalorder %s73, %s89
      %p91 = scmp.eq.s32.totalorder %s18, 0
      %p92 = por %p90, %p91
      %p93 = scmp.le.s32.totalorder 1, %s12
      %p94 = scmp.lt.s32.totalorder %s12, 3
      %p95 = pnand %p93, %p94
      %p96 = pneg %p95
      // Predicated region
      $region9: #{tpu_custom_call.1} parent=5 // pred_check
        _
      $region10: #{tpu_custom_call.1} parent=5 // pred_check_branch
        %98 = sbr.rel (%p95) target = $region12
      $region11: #{tpu_custom_call.1} parent=5 // pred_region
        %s99 = ssub.s32 %s12, 1
        // Predicated region
        $region13: #{tpu_custom_call.1} parent=11 // pred_check
          %p100 = pneg %p59
        $region14: #{tpu_custom_call.1} parent=11 // pred_check_branch
          %102 = sbr.rel (%p100) target = $region16
        $region15: #{tpu_custom_call.1} parent=11 // pred_region
          %104 = vsyncadd [#allocation3], 0
          %s105 = sshll.u32 %s1, 4
          %s106 = int_to_ptr.hbm [resolvable:$true] %s105
          %s107 = sshll.u32 [#allocation2], 4
          %s108 = int_to_ptr.vmem [resolvable:$true] %s107
          %113 = dma.hbm_to_vmem [thread:$0]  %s106, 1024, %s108, [#allocation3], 128, 128, 8
        $region16: #{tpu_custom_call.1} parent=11 // pred_fallthru
          _
      $region12: #{tpu_custom_call.1} parent=5 // pred_fallthru
        _
      %p114 = scmp.lt.s32.totalorder %s12, 2
      // Predicated region
      $region17: #{tpu_custom_call.1} parent=5 // pred_check
        %p115 = pneg %p114
      $region18: #{tpu_custom_call.1} parent=5 // pred_check_branch
        %117 = sbr.rel (%p115) target = $region20
      $region19: #{tpu_custom_call.1} parent=5 // pred_region
        // Predicated region
        $region21: #{tpu_custom_call.1} parent=19 // pred_check
          %p118 = pneg %p32
        $region22: #{tpu_custom_call.1} parent=19 // pred_check_branch
          %120 = sbr.rel (%p118) target = $region24
        $region23: #{tpu_custom_call.1} parent=19 // pred_region
          %p121 = scmp.lt.s32.totalorder %s12, 1
          %s122 = scalar_select %p121, %s12, 1
          %s123 = smul.addr %s122, 8
          %s124 = scalar_lea.vmem %s0, %s123
        $region24: #{tpu_custom_call.1} parent=19 // pred_fallthru
          _
      $region20: #{tpu_custom_call.1} parent=5 // pred_fallthru
        _
      %p125 = scmp.le.s32.totalorder 1, %s12
      %p126 = scmp.lt.s32.totalorder %s12, 3
      %p127 = pnand %p125, %p126
      %p128 = pneg %p127
      // Predicated region
      $region25: #{tpu_custom_call.1} parent=5 // pred_check
        _
      $region26: #{tpu_custom_call.1} parent=5 // pred_check_branch
        %130 = sbr.rel (%p127) target = $region28
      $region27: #{tpu_custom_call.1} parent=5 // pred_region
        %s131 = ssub.s32 %s12, 1
        // Predicated region
        $region29: #{tpu_custom_call.1} parent=27 // pred_check
          %p132 = pneg %p59
        $region30: #{tpu_custom_call.1} parent=27 // pred_check_branch
          %134 = sbr.rel (%p132) target = $region32
        $region31: #{tpu_custom_call.1} parent=27 // pred_region
          %136 = dma.done [#allocation3], 1024
        $region32: #{tpu_custom_call.1} parent=27 // pred_fallthru
          _
        %p137 = scmp.lt.s32.totalorder %s17, 1
        %s138 = scalar_select %p137, %s17, 1
        %s139 = smul.addr %s138, 8
        %s140 = scalar_lea.vmem %s0, %s139
        %p141 = pneg %p38
        %p142 = pneg %p35
        %p143 = pneg %p59
        %p144 = pneg %p56
        %p145 = pneg %p85
        %p146 = pneg %p82
        %s147 = sand.u32 %s72, 1
        %s148 = scalar_lea.sflag [#allocation4], %s147
        %s149 = sand.u32 %s72, 1
        %s150 = smul.addr %s149, 8
        %s151 = scalar_lea.vmem [#allocation5], %s150
        %p152 = scmp.lt.s32.totalorder %s17, 1
        %s153 = scalar_select %p152, %s17, 1
        %s154 = smul.addr %s153, 8
        %s155 = scalar_lea.vmem %s0, %s154
        %v156 = vld [vmem:[%s155] sm:$0xff]
        %v157 = vlaneseq
        %v158 = vand.u32 %v157, 127
        %159 = vset.pattern.permute.xlu0 0
        %160 = vperm.xlu0 %159, %v156
        %v161 = vpop.permute.xlu0 %160
        %vm162 = vcmp.eq.s32.totalorder %v158, %v161
        %v163 = vsel %vm162, 1, 0
        %v164 = vcvt.s32.f32 %v163
        %v165 = vld [vmem:[#allocation2] sm:$0xff]
        %v166 = vld [vmem:[#allocation2 + $0x8] sm:$0xff]
        %v167 = vld [vmem:[#allocation2 + $0x10] sm:$0xff]
        %v168 = vld [vmem:[#allocation2 + $0x18] sm:$0xff]
        %v169 = vld [vmem:[#allocation2 + $0x20] sm:$0xff]
        %v170 = vld [vmem:[#allocation2 + $0x28] sm:$0xff]
        %v171 = vld [vmem:[#allocation2 + $0x30] sm:$0xff]
        %v172 = vld [vmem:[#allocation2 + $0x38] sm:$0xff]
        %vm173 = vcmask 523264
        %v175 = vsel %vm173, %v164, 0
        %177 = vmatpush.msra.mxu0 0.0
        %178 = vmatpush.msra.mxu0 0.0
        %179 = vmatpush.msra.mxu0 0.0
        %180 = vmatpush.msra.mxu0 0.0
        %181 = vmatpush.msra.mxu0 0.0
        %182 = vmatpush.msra.mxu0 0.0
        %183 = vmatpush.msra.mxu0 0.0
        %184 = vmatpush.msra.mxu0 0.0
        %185 = vmatpush.msra.mxu0 %v172
        %186 = vmatpush.msra.mxu0 %v171
        %187 = vmatpush.msra.mxu0 %v170
        %188 = vmatpush.msra.mxu0 %v169
        %189 = vmatpush.msra.mxu0 %v168
        %190 = vmatpush.msra.mxu0 %v167
        %191 = vmatpush.msra.mxu0 %v166
        %192 = vmatpush.msra.mxu0 %v165
        %193 = vmatmul.f32.gmra.mxu0 %v175
        %v194 = vpop.f32.mrf.mxu0
        %v195 = vadd.f32 0.0, %v194
        %196 = vdwg.mxu0
        %197 = vst [vmem:[%s151] sm:$0xff] %v195
        %s198 = sand.u32 %s72, 1
        %s199 = scalar_lea.sflag [#allocation4], %s198
        %s200 = sand.u32 %s72, 1
        %s201 = smul.addr %s200, 8
        %s202 = scalar_lea.vmem [#allocation5], %s201
        // Predicated region
        $region33: #{tpu_custom_call.1} parent=27 // pred_check
          %p203 = pneg %p82
        $region34: #{tpu_custom_call.1} parent=27 // pred_check_branch
          %205 = sbr.rel (%p203) target = $region36
        $region35: #{tpu_custom_call.1} parent=27 // pred_region
          %207 = vsyncadd %s199, 0
          %s208 = smul.addr %s17, 8
          %s209 = scalar_lea.hbm %s2, %s208
          %s211 = sshll.u32 %s202, 4
          %s212 = int_to_ptr.vmem [resolvable:$true] %s211
          %s213 = sshll.u32 %s209, 4
          %s214 = int_to_ptr.hbm [resolvable:$true] %s213
          %216 = dma.vmem_to_hbm [thread:$0]  %s212, 128, %s214, %s199
        $region36: #{tpu_custom_call.1} parent=27 // pred_fallthru
          _
      $region28: #{tpu_custom_call.1} parent=5 // pred_fallthru
        _
      %p217 = scmp.le.s32.totalorder 2, %s12
      // Predicated region
      $region37: #{tpu_custom_call.1} parent=5 // pred_check
        %p218 = pneg %p217
      $region38: #{tpu_custom_call.1} parent=5 // pred_check_branch
        %220 = sbr.rel (%p218) target = $region40
      $region39: #{tpu_custom_call.1} parent=5 // pred_region
        %s221 = ssub.s32 %s12, 2
        // Predicated region
        $region41: #{tpu_custom_call.1} parent=39 // pred_check
          %p222 = pneg %p88
        $region42: #{tpu_custom_call.1} parent=39 // pred_check_branch
          %224 = sbr.rel (%p222) target = $region44
        $region43: #{tpu_custom_call.1} parent=39 // pred_region
          %s225 = sand.u32 %s73, 1
          %s226 = scalar_lea.sflag [#allocation4], %s225
          %s227 = sand.u32 %s73, 1
          %s228 = smul.addr %s227, 8
          %s229 = scalar_lea.vmem [#allocation5], %s228
          %231 = dma.done %s226, 128
        $region44: #{tpu_custom_call.1} parent=39 // pred_fallthru
          _
      $region40: #{tpu_custom_call.1} parent=5 // pred_fallthru
        _
    $region6: #{tpu_custom_call.1} parent=1 // loop_footer
      %s16 = sadd.s32 1, %s12
    $region7: #{tpu_custom_call.1} parent=1 // loop_footer_branch
      %11 = sbr.rel target = $region3
    $region8: #{tpu_custom_call.1} parent=1 // loop_exit
      _
    %232 = vsyncpa [#allocation3], 1
    %s233 = scalar_lea.sflag [#allocation3], 1
    %234 = vsyncpa %s233, 1
    %235 = vsyncpa [#allocation4], 1
    %s236 = scalar_lea.sflag [#allocation4], 1
    %237 = vsyncpa %s236, 1

</llo_original>
